<compile_context>
chip_gen: v7x
topology: tpu7x:2x2x1
jax: 0.10.0
libtpu: 0.0.40
codegen_flags: <defaults>
</compile_context>

<pallas_src>
import functools

import jax
import jax.numpy as jnp
from jax.experimental import pallas as pl
from jax.experimental.pallas import tpu as pltpu


def _round_up(x, m):
    return ((x + m - 1) // m) * m


def _ffn_kernel(x_ref, w1_ref, b1_ref, w2_ref, b2_ref, o_ref, acc_ref):
    # x_ref:  (tm, idim_p)        bf16 tile of input rows
    # w1_ref: (idim_p, th)        bf16 slice of w1 (hidden-tiled)
    # b1_ref: (1, th)             f32
    # w2_ref: (th, idim_p)        bf16 slice of w2 (hidden-tiled)
    # b2_ref: (1, idim_p)         f32
    # o_ref:  (tm, idim_p)        output tile (x.dtype)
    # acc_ref:(tm, idim_p)        f32 accumulator over the hidden-tile axis
    k = pl.program_id(1)

    @pl.when(k == 0)
    def _init():
        acc_ref[...] = jnp.zeros_like(acc_ref)

    # First matmul (MXU, f32 accumulation) + f32 epilogue (VPU).
    h = jnp.dot(x_ref[...], w1_ref[...], preferred_element_type=jnp.float32)
    h = jnp.maximum(h + b1_ref[...], 0.0)      # ReLU; dropout = identity (eval)

    # Second matmul: accumulate partial product of this hidden slice.
    acc_ref[...] += jnp.dot(h.astype(w2_ref.dtype), w2_ref[...],
                            preferred_element_type=jnp.float32)

    @pl.when(k == pl.num_programs(1) - 1)
    def _finalize():
        o_ref[...] = (acc_ref[...] + b2_ref[...]).astype(o_ref.dtype)


@functools.partial(jax.jit,
                   static_argnames=("tile_m", "block_h", "compute_dtype"))
def positionwise_feed_forward(x, w1, b1, w2, b2, *,
                              tile_m=256, block_h=512,
                              compute_dtype=jnp.bfloat16):
    """x: (B, T, idim). w1: (idim, hidden), w2: (hidden, idim). Returns (B, T, idim)."""
    B, T, idim = x.shape
    hidden = w1.shape[1]
    M = B * T

    # --- padding so every BlockSpec dim is (8, 128)-aligned and lane-dense ---
    idim_p = _round_up(idim, 128)
    hidden_128 = _round_up(hidden, 128)
    th = min(_round_up(block_h, 128), hidden_128)     # hidden tile (multiple of 128)
    hidden_p = _round_up(hidden_128, th)
    m_p = _round_up(M, tile_m)

    x2d = jnp.pad(x.reshape(M, idim).astype(compute_dtype),
                  ((0, m_p - M), (0, idim_p - idim)))
    w1p = jnp.pad(w1.astype(compute_dtype),
                  ((0, idim_p - idim), (0, hidden_p - hidden)))
    b1p = jnp.pad(b1.astype(jnp.float32),
                  (0, hidden_p - hidden)).reshape(1, hidden_p)
    w2p = jnp.pad(w2.astype(compute_dtype),
                  ((0, hidden_p - hidden), (0, idim_p - idim)))
    b2p = jnp.pad(b2.astype(jnp.float32),
                  (0, idim_p - idim)).reshape(1, idim_p)

    grid = (m_p // tile_m, hidden_p // th)

    # --- VMEM budget: double-buffered tiles + f32 accumulator + headroom ---
    cb = jnp.dtype(compute_dtype).itemsize
    ob = jnp.dtype(x.dtype).itemsize
    vmem_needed = 2 * (tile_m * idim_p * cb          # x tile
                       + idim_p * th * cb            # w1 tile
                       + th * 4                      # b1 tile
                       + th * idim_p * cb            # w2 tile
                       + idim_p * 4                  # b2 tile
                       + tile_m * idim_p * ob)       # out tile
    vmem_needed += tile_m * idim_p * 4               # accumulator scratch
    vmem_limit = min(int(vmem_needed * 1.5) + (8 << 20), 100 << 20)

    flops = 4 * m_p * idim_p * hidden_p              # two matmuls
    bytes_accessed = (m_p * idim_p * cb
                      + grid[0] * (idim_p * hidden_p * cb + hidden_p * idim_p * cb)
                      + m_p * idim_p * ob)
    cost = pl.CostEstimate(flops=flops, transcendentals=0,
                           bytes_accessed=int(bytes_accessed))

    out2d = pl.pallas_call(
        _ffn_kernel,
        out_shape=jax.ShapeDtypeStruct((m_p, idim_p), x.dtype),
        grid_spec=pltpu.PrefetchScalarGridSpec(
            num_scalar_prefetch=0,
            grid=grid,
            in_specs=[
                pl.BlockSpec((tile_m, idim_p), lambda i, k: (i, 0)),
                pl.BlockSpec((idim_p, th), lambda i, k: (0, k)),
                pl.BlockSpec((1, th), lambda i, k: (0, k)),
                pl.BlockSpec((th, idim_p), lambda i, k: (k, 0)),
                pl.BlockSpec((1, idim_p), lambda i, k: (0, 0)),
            ],
            out_specs=pl.BlockSpec((tile_m, idim_p), lambda i, k: (i, 0)),
            scratch_shapes=[pltpu.VMEM((tile_m, idim_p), jnp.float32)],
        ),
        compiler_params=pltpu.CompilerParams(
            dimension_semantics=("parallel", "arbitrary"),
            vmem_limit_bytes=vmem_limit),
        cost_estimate=cost,
    )(x2d, w1p, b1p, w2p, b2p)

    return out2d[:M, :idim].reshape(B, T, idim)


def _init_linear_params(key, in_features, out_features, dtype=jnp.float32):
    """Mimics torch.nn.Linear default init (uniform +-1/sqrt(fan_in)).

    Returns weight in (in_features, out_features) layout (transposed vs torch).
    """
    kw, kb = jax.random.split(key)
    bound = 1.0 / jnp.sqrt(jnp.asarray(in_features, dtype))
    w = jax.random.uniform(kw, (in_features, out_features), dtype,
                           minval=-bound, maxval=bound)
    b = jax.random.uniform(kb, (out_features,), dtype,
                           minval=-bound, maxval=bound)
    return w, b


if __name__ == "__main__":
    # Small shapes consistent with the module's forward: (batch, seq, idim).
    B, T = 2, 8
    idim, hidden_units = 32, 64
    dropout_rate = 0.1  # identity in eval mode

    root = jax.random.PRNGKey(0)
    kx, k1, k2 = jax.random.split(root, 3)

    x = jax.random.normal(kx, (B, T, idim), jnp.float32)
    w1, b1 = _init_linear_params(k1, idim, hidden_units)   # w_1: idim -> hidden
    w2, b2 = _init_linear_params(k2, hidden_units, idim)   # w_2: hidden -> idim

    out = positionwise_feed_forward(x, w1, b1, w2, b2)
    out = jax.block_until_ready(out)
    assert out.shape == (B, T, idim)

    # Reference following the same bf16-operand / f32-accumulate path.
    xb = x.astype(jnp.bfloat16)
    h_ref = jnp.maximum(
        jnp.einsum("btd,dh->bth", xb, w1.astype(jnp.bfloat16),
                   preferred_element_type=jnp.float32) + b1, 0.0)
    ref_bf16 = jnp.einsum("bth,hd->btd", h_ref.astype(jnp.bfloat16),
                          w2.astype(jnp.bfloat16),
                          preferred_element_type=jnp.float32) + b2
    assert jnp.allclose(out, ref_bf16, atol=2e-2, rtol=2e-2), \
        "mismatch vs bf16-path reference"

    # Sanity check against the pure-f32 math (looser tolerance for bf16 operands).
    ref_f32 = jnp.maximum(x @ w1 + b1, 0.0) @ w2 + b2
    assert jnp.allclose(out, ref_f32, atol=5e-2, rtol=5e-2), \
        "mismatch vs f32 reference"

    print("KERNEL_OK")
</pallas_src>

<mosaic_0001>
module attributes {stable_mosaic.version = 11 : i64} {
  func.func @_ffn_kernel(%arg0: i32, %arg1: i32, %arg2: memref<256x128xbf16, #tpu.memory_space<vmem>>, %arg3: memref<128x128xbf16, #tpu.memory_space<vmem>>, %arg4: memref<1x128xf32, #tpu.memory_space<vmem>>, %arg5: memref<128x128xbf16, #tpu.memory_space<vmem>>, %arg6: memref<1x128xf32, #tpu.memory_space<vmem>>, %arg7: memref<256x128xf32, #tpu.memory_space<vmem>>, %arg8: memref<256x128xf32, #tpu.memory_space<vmem>>) attributes {dimension_semantics = [#tpu.dimension_semantics<parallel>, #tpu.dimension_semantics<arbitrary>], iteration_bounds = array<i64: 1, 1>, scalar_prefetch = 0 : i64, scratch_operands = 1 : i64, tpu.core_type = #tpu.core_type<tc>, window_params = [{transform_indices = @transform_0, window_bounds = array<i64: 256, 128>}, {transform_indices = @transform_1, window_bounds = array<i64: 128, 128>}, {transform_indices = @transform_2, window_bounds = array<i64: 1, 128>}, {transform_indices = @transform_3, window_bounds = array<i64: 128, 128>}, {pipeline_mode = #tpu.pipeline_mode<synchronous>, transform_indices = @transform_4, window_bounds = array<i64: 1, 128>}, {transform_indices = @transform_5, window_bounds = array<i64: 256, 128>}]} {
    %c0_i32 = arith.constant 0 : i32
    %0 = arith.cmpi eq, %arg1, %c0_i32 : i32
    %1 = arith.extui %0 : i1 to i32
    %c0_i32_0 = arith.constant 0 : i32
    %2 = arith.cmpi ne, %1, %c0_i32_0 : i32
    scf.if %2 {
      %cst_16 = arith.constant 0.000000e+00 : f32
      %20 = vector.broadcast %cst_16 : f32 to vector<256x128xf32>
      %c0_17 = arith.constant 0 : index
      %c0_18 = arith.constant 0 : index
      %21 = vector.load %arg8[%c0_17, %c0_18] : memref<256x128xf32, #tpu.memory_space<vmem>>, vector<256x128xf32>
      tpu.vector_store %arg8[%c0_17, %c0_18], %20 {strides = array<i32>} : memref<256x128xf32, #tpu.memory_space<vmem>>, vector<256x128xf32>,
    } else {
    }
    %c0 = arith.constant 0 : index
    %c0_1 = arith.constant 0 : index
    %3 = vector.load %arg2[%c0, %c0_1] : memref<256x128xbf16, #tpu.memory_space<vmem>>, vector<256x128xbf16>
    %c0_2 = arith.constant 0 : index
    %c0_3 = arith.constant 0 : index
    %4 = vector.load %arg3[%c0_2, %c0_3] : memref<128x128xbf16, #tpu.memory_space<vmem>>, vector<128x128xbf16>
    %cst = arith.constant dense<0.000000e+00> : vector<256x128xf32>
    %5 = tpu.matmul %3, %4, %cst {dimension_numbers = #tpu.dot_dimension_numbers<[1], [0], [0], [1], [0, 0, 1, 1], [], []>} : vector<256x128xbf16>, vector<128x128xbf16>, vector<256x128xf32> -> vector<256x128xf32>
    %c0_4 = arith.constant 0 : index
    %c0_5 = arith.constant 0 : index
    %6 = vector.load %arg4[%c0_4, %c0_5] : memref<1x128xf32, #tpu.memory_space<vmem>>, vector<1x128xf32>
    %7 = vector.broadcast %6 : vector<1x128xf32> to vector<256x128xf32>
    %8 = arith.addf %5, %7 : vector<256x128xf32>
    %cst_6 = arith.constant 0.000000e+00 : f32
    %9 = vector.broadcast %cst_6 : f32 to vector<256x128xf32>
    %10 = arith.maximumf %8, %9 : vector<256x128xf32>
    %c0_7 = arith.constant 0 : index
    %c0_8 = arith.constant 0 : index
    %11 = vector.load %arg8[%c0_7, %c0_8] : memref<256x128xf32, #tpu.memory_space<vmem>>, vector<256x128xf32>
    %12 = arith.truncf %10 : vector<256x128xf32> to vector<256x128xbf16>
    %c0_9 = arith.constant 0 : index
    %c0_10 = arith.constant 0 : index
    %13 = vector.load %arg5[%c0_9, %c0_10] : memref<128x128xbf16, #tpu.memory_space<vmem>>, vector<128x128xbf16>
    %cst_11 = arith.constant dense<0.000000e+00> : vector<256x128xf32>
    %14 = tpu.matmul %12, %13, %cst_11 {dimension_numbers = #tpu.dot_dimension_numbers<[1], [0], [0], [1], [0, 0, 1, 1], [], []>} : vector<256x128xbf16>, vector<128x128xbf16>, vector<256x128xf32> -> vector<256x128xf32>
    %15 = arith.addf %11, %14 : vector<256x128xf32>
    %c0_12 = arith.constant 0 : index
    %c0_13 = arith.constant 0 : index
    %16 = vector.load %arg8[%c0_12, %c0_13] : memref<256x128xf32, #tpu.memory_space<vmem>>, vector<256x128xf32>
    tpu.vector_store %arg8[%c0_12, %c0_13], %15 {strides = array<i32>} : memref<256x128xf32, #tpu.memory_space<vmem>>, vector<256x128xf32>,
    %c0_i32_14 = arith.constant 0 : i32
    %17 = arith.cmpi eq, %arg1, %c0_i32_14 : i32
    %18 = arith.extui %17 : i1 to i32
    %c0_i32_15 = arith.constant 0 : i32
    %19 = arith.cmpi ne, %18, %c0_i32_15 : i32
    scf.if %19 {
      %c0_16 = arith.constant 0 : index
      %c0_17 = arith.constant 0 : index
      %20 = vector.load %arg8[%c0_16, %c0_17] : memref<256x128xf32, #tpu.memory_space<vmem>>, vector<256x128xf32>
      %c0_18 = arith.constant 0 : index
      %c0_19 = arith.constant 0 : index
      %21 = vector.load %arg6[%c0_18, %c0_19] : memref<1x128xf32, #tpu.memory_space<vmem>>, vector<1x128xf32>
      %22 = vector.broadcast %21 : vector<1x128xf32> to vector<256x128xf32>
      %23 = arith.addf %20, %22 : vector<256x128xf32>
      %c0_20 = arith.constant 0 : index
      %c0_21 = arith.constant 0 : index
      %24 = vector.load %arg7[%c0_20, %c0_21] : memref<256x128xf32, #tpu.memory_space<vmem>>, vector<256x128xf32>
      tpu.vector_store %arg7[%c0_20, %c0_21], %23 {strides = array<i32>} : memref<256x128xf32, #tpu.memory_space<vmem>>, vector<256x128xf32>,
    } else {
    }
    return
  }
  func.func @transform_0(%arg0: i32, %arg1: i32) -> (i32, i32) {
    %c0_i32 = arith.constant 0 : i32
    %c0_i32_0 = arith.constant 0 : i32
    return %arg0, %c0_i32 : i32, i32
  }
  func.func @transform_1(%arg0: i32, %arg1: i32) -> (i32, i32) {
    %c0_i32 = arith.constant 0 : i32
    %c0_i32_0 = arith.constant 0 : i32
    return %c0_i32, %arg1 : i32, i32
  }
  func.func @transform_2(%arg0: i32, %arg1: i32) -> (i32, i32) {
    %c0_i32 = arith.constant 0 : i32
    %c0_i32_0 = arith.constant 0 : i32
    return %c0_i32, %arg1 : i32, i32
  }
  func.func @transform_3(%arg0: i32, %arg1: i32) -> (i32, i32) {
    %c0_i32 = arith.constant 0 : i32
    %c0_i32_0 = arith.constant 0 : i32
    return %arg1, %c0_i32 : i32, i32
  }
  func.func @transform_4(%arg0: i32, %arg1: i32) -> (i32, i32) {
    %c0_i32 = arith.constant 0 : i32
    %c0_i32_0 = arith.constant 0 : i32
    %c0_i32_1 = arith.constant 0 : i32
    return %c0_i32, %c0_i32_0 : i32, i32
  }
  func.func @transform_5(%arg0: i32, %arg1: i32) -> (i32, i32) {
    %c0_i32 = arith.constant 0 : i32
    %c0_i32_0 = arith.constant 0 : i32
    return %arg0, %c0_i32 : i32, i32
  }
}

</mosaic_0001>

<llo_original>
// kernel: positionwise_feed_forward.1
$region0: #{positionwise_feed_forward.1}
  #allocation0 [shape = 'u32[]', space=smem, size = 0x4, offset = 0x4, fixed_abs, tag = 'smem constant byte address 0x4 - core index']
  #allocation1 [shape = 'u32[144,128]{1,0:T(1,128)}', space=vmem, size = 0x12000, scoped, tag = 'internal scratch']
  #allocation2 [shape = 'f32[256,128]{1,0:T(8,128)}', space=vmem, size = 0x20000, scoped, tag = 'scratch operand']
  %s0 = inlined_call_operand.vmem [shape: bf16[256,128], index: 0, kind: input, shape index: {}]
  %s1 = inlined_call_operand.vmem [shape: bf16[128,128], index: 1, kind: input, shape index: {}]
  %s2 = inlined_call_operand.vmem [shape: f32[1,128], index: 2, kind: input, shape index: {}]
  %s3 = inlined_call_operand.vmem [shape: bf16[128,128], index: 3, kind: input, shape index: {}]
  %s4 = inlined_call_operand.vmem [shape: f32[1,128], index: 4, kind: input, shape index: {}]
  %s5 = inlined_call_operand.vmem [shape: f32[256,128], index: 5, kind: output, shape index: {}]
  %s6 = sld [smem:[#allocation0]]
  $region38: #{positionwise_feed_forward.1} parent=0
    _
  %s8 = ssub.s32 1, %s6
  %s9 = scalar_select 0, %s8, %s6
  // Predicated region
  $region2: #{positionwise_feed_forward.1} parent=0 // pred_check
    _
  $region3: #{positionwise_feed_forward.1} parent=0 // pred_check_branch
    %11 = sbr.rel (0) target = $region5
  $region4: #{positionwise_feed_forward.1} parent=0 // pred_region
    _
  $region5: #{positionwise_feed_forward.1} parent=0 // pred_fallthru
    _
  // Predicated region
  $region6: #{positionwise_feed_forward.1} parent=0 // pred_check
    _
  $region7: #{positionwise_feed_forward.1} parent=0 // pred_check_branch
    %13 = sbr.rel (0) target = $region9
  $region8: #{positionwise_feed_forward.1} parent=0 // pred_region
    _
  $region9: #{positionwise_feed_forward.1} parent=0 // pred_fallthru
    _
  // Predicated region
  $region10: #{positionwise_feed_forward.1} parent=0 // pred_check
    _
  $region11: #{positionwise_feed_forward.1} parent=0 // pred_check_branch
    %15 = sbr.rel (0) target = $region13
  $region12: #{positionwise_feed_forward.1} parent=0 // pred_region
    _
  $region13: #{positionwise_feed_forward.1} parent=0 // pred_fallthru
    _
  // Predicated region
  $region14: #{positionwise_feed_forward.1} parent=0 // pred_check
    _
  $region15: #{positionwise_feed_forward.1} parent=0 // pred_check_branch
    %17 = sbr.rel (0) target = $region17
  $region16: #{positionwise_feed_forward.1} parent=0 // pred_region
    _
  $region17: #{positionwise_feed_forward.1} parent=0 // pred_fallthru
    _
  // Predicated region
  $region18: #{positionwise_feed_forward.1} parent=0 // pred_check
    _
  $region19: #{positionwise_feed_forward.1} parent=0 // pred_check_branch
    %19 = sbr.rel (0) target = $region21
  $region20: #{positionwise_feed_forward.1} parent=0 // pred_region
    _
  $region21: #{positionwise_feed_forward.1} parent=0 // pred_fallthru
    _
  %p21 = scmp.eq.s32.totalorder 0, 0
  // Predicated region
  $region22: #{positionwise_feed_forward.1} parent=0 // pred_check
    %p22 = pneg %p21
  $region23: #{positionwise_feed_forward.1} parent=0 // pred_check_branch
    %24 = sbr.rel (%p22) target = $region25
  $region24: #{positionwise_feed_forward.1} parent=0 // pred_region
    %25 = vst [vmem:[#allocation2] sm:$0xff] 0.0
    %26 = vst [vmem:[#allocation2 + $0x8] sm:$0xff] 0.0
    %27 = vst [vmem:[#allocation2 + $0x10] sm:$0xff] 0.0
    %28 = vst [vmem:[#allocation2 + $0x18] sm:$0xff] 0.0
    %29 = vst [vmem:[#allocation2 + $0x20] sm:$0xff] 0.0
    %30 = vst [vmem:[#allocation2 + $0x28] sm:$0xff] 0.0
    %31 = vst [vmem:[#allocation2 + $0x30] sm:$0xff] 0.0
    %32 = vst [vmem:[#allocation2 + $0x38] sm:$0xff] 0.0
    %33 = vst [vmem:[#allocation2 + $0x40] sm:$0xff] 0.0
    %34 = vst [vmem:[#allocation2 + $0x48] sm:$0xff] 0.0
    %35 = vst [vmem:[#allocation2 + $0x50] sm:$0xff] 0.0
    %36 = vst [vmem:[#allocation2 + $0x58] sm:$0xff] 0.0
    %37 = vst [vmem:[#allocation2 + $0x60] sm:$0xff] 0.0
    %38 = vst [vmem:[#allocation2 + $0x68] sm:$0xff] 0.0
    %39 = vst [vmem:[#allocation2 + $0x70] sm:$0xff] 0.0
    %40 = vst [vmem:[#allocation2 + $0x78] sm:$0xff] 0.0
    %41 = vst [vmem:[#allocation2 + $0x80] sm:$0xff] 0.0
    %42 = vst [vmem:[#allocation2 + $0x88] sm:$0xff] 0.0
    %43 = vst [vmem:[#allocation2 + $0x90] sm:$0xff] 0.0
    %44 = vst [vmem:[#allocation2 + $0x98] sm:$0xff] 0.0
    %45 = vst [vmem:[#allocation2 + $0xa0] sm:$0xff] 0.0
    %46 = vst [vmem:[#allocation2 + $0xa8] sm:$0xff] 0.0
    %47 = vst [vmem:[#allocation2 + $0xb0] sm:$0xff] 0.0
    %48 = vst [vmem:[#allocation2 + $0xb8] sm:$0xff] 0.0
    %49 = vst [vmem:[#allocation2 + $0xc0] sm:$0xff] 0.0
    %50 = vst [vmem:[#allocation2 + $0xc8] sm:$0xff] 0.0
    %51 = vst [vmem:[#allocation2 + $0xd0] sm:$0xff] 0.0
    %52 = vst [vmem:[#allocation2 + $0xd8] sm:$0xff] 0.0
    %53 = vst [vmem:[#allocation2 + $0xe0] sm:$0xff] 0.0
    %54 = vst [vmem:[#allocation2 + $0xe8] sm:$0xff] 0.0
    %55 = vst [vmem:[#allocation2 + $0xf0] sm:$0xff] 0.0
    %56 = vst [vmem:[#allocation2 + $0xf8] sm:$0xff] 0.0
  $region25: #{positionwise_feed_forward.1} parent=0 // pred_fallthru
    _
  %v57 = vld [vmem:[%s0] sm:$0xf]
  %v58 = vld [vmem:[%s0 + $0x4] sm:$0xf]
  %v59 = vld [vmem:[%s0 + $0x8] sm:$0xf]
  %v60 = vld [vmem:[%s0 + $0xc] sm:$0xf]
  %v61 = vld [vmem:[%s0 + $0x10] sm:$0xf]
  %v62 = vld [vmem:[%s0 + $0x14] sm:$0xf]
  %v63 = vld [vmem:[%s0 + $0x18] sm:$0xf]
  %v64 = vld [vmem:[%s0 + $0x1c] sm:$0xf]
  %v65 = vld [vmem:[%s0 + $0x20] sm:$0xf]
  %v66 = vld [vmem:[%s0 + $0x24] sm:$0xf]
  %v67 = vld [vmem:[%s0 + $0x28] sm:$0xf]
  %v68 = vld [vmem:[%s0 + $0x2c] sm:$0xf]
  %v69 = vld [vmem:[%s0 + $0x30] sm:$0xf]
  %v70 = vld [vmem:[%s0 + $0x34] sm:$0xf]
  %v71 = vld [vmem:[%s0 + $0x38] sm:$0xf]
  %v72 = vld [vmem:[%s0 + $0x3c] sm:$0xf]
  %v73 = vld [vmem:[%s0 + $0x40] sm:$0xf]
  %v74 = vld [vmem:[%s0 + $0x44] sm:$0xf]
  %v75 = vld [vmem:[%s0 + $0x48] sm:$0xf]
  %v76 = vld [vmem:[%s0 + $0x4c] sm:$0xf]
  %v77 = vld [vmem:[%s0 + $0x50] sm:$0xf]
  %v78 = vld [vmem:[%s0 + $0x54] sm:$0xf]
  %v79 = vld [vmem:[%s0 + $0x58] sm:$0xf]
  %v80 = vld [vmem:[%s0 + $0x5c] sm:$0xf]
  %v81 = vld [vmem:[%s0 + $0x60] sm:$0xf]
  %v82 = vld [vmem:[%s0 + $0x64] sm:$0xf]
  %v83 = vld [vmem:[%s0 + $0x68] sm:$0xf]
  %v84 = vld [vmem:[%s0 + $0x6c] sm:$0xf]
  %v85 = vld [vmem:[%s0 + $0x70] sm:$0xf]
  %v86 = vld [vmem:[%s0 + $0x74] sm:$0xf]
  %v87 = vld [vmem:[%s0 + $0x78] sm:$0xf]
  %v88 = vld [vmem:[%s0 + $0x7c] sm:$0xf]
  %v89 = vld [vmem:[%s1] sm:$0xf]
  %v90 = vld [vmem:[%s1 + $0x4] sm:$0xf]
  %v91 = vld [vmem:[%s1 + $0x8] sm:$0xf]
  %v92 = vld [vmem:[%s1 + $0xc] sm:$0xf]
  %v93 = vld [vmem:[%s1 + $0x10] sm:$0xf]
  %v94 = vld [vmem:[%s1 + $0x14] sm:$0xf]
  %v95 = vld [vmem:[%s1 + $0x18] sm:$0xf]
  %v96 = vld [vmem:[%s1 + $0x1c] sm:$0xf]
  %v97 = vld [vmem:[%s1 + $0x20] sm:$0xf]
  %v98 = vld [vmem:[%s1 + $0x24] sm:$0xf]
  %v99 = vld [vmem:[%s1 + $0x28] sm:$0xf]
  %v100 = vld [vmem:[%s1 + $0x2c] sm:$0xf]
  %v101 = vld [vmem:[%s1 + $0x30] sm:$0xf]
  %v102 = vld [vmem:[%s1 + $0x34] sm:$0xf]
  %v103 = vld [vmem:[%s1 + $0x38] sm:$0xf]
  %v104 = vld [vmem:[%s1 + $0x3c] sm:$0xf]
  %v105 = vld [vmem:[%s2] sm:$0x1]
  %v107 = vlaneseq
  %v108 = vshrl.u32 %v107, 7
  %v109 = vsub.s32 0, %v108
  %v110 = vrot.slane %v105, %v109
  %v144 = vunpack.c.l.b16 %v57
  %v145 = vunpack.c.l.b16 %v58
  %v146 = vunpack.c.l.b16 %v59
  %v147 = vunpack.c.l.b16 %v60
  %v148 = vunpack.c.l.b16 %v61
  %v149 = vunpack.c.l.b16 %v62
  %v150 = vunpack.c.l.b16 %v63
  %v151 = vunpack.c.l.b16 %v64
  %v152 = vunpack.c.l.b16 %v65
  %v153 = vunpack.c.l.b16 %v66
  %v154 = vunpack.c.l.b16 %v67
  %v155 = vunpack.c.l.b16 %v68
  %v156 = vunpack.c.l.b16 %v69
  %v157 = vunpack.c.l.b16 %v70
  %v158 = vunpack.c.l.b16 %v71
  %v159 = vunpack.c.l.b16 %v72
  %v160 = vunpack.c.l.b16 %v73
  %v161 = vunpack.c.l.b16 %v74
  %v162 = vunpack.c.l.b16 %v75
  %v163 = vunpack.c.l.b16 %v76
  %v164 = vunpack.c.l.b16 %v77
  %v165 = vunpack.c.l.b16 %v78
  %v166 = vunpack.c.l.b16 %v79
  %v167 = vunpack.c.l.b16 %v80
  %v168 = vunpack.c.l.b16 %v81
  %v169 = vunpack.c.l.b16 %v82
  %v170 = vunpack.c.l.b16 %v83
  %v171 = vunpack.c.l.b16 %v84
  %v172 = vunpack.c.l.b16 %v85
  %v173 = vunpack.c.l.b16 %v86
  %v174 = vunpack.c.l.b16 %v87
  %v175 = vunpack.c.l.b16 %v88
  %v176 = vpack.c.b16 %v145, %v144
  %v177 = vpack.c.b16 %v147, %v146
  %v178 = vpack.c.b16 %v149, %v148
  %v179 = vpack.c.b16 %v151, %v150
  %v180 = vpack.c.b16 %v153, %v152
  %v181 = vpack.c.b16 %v155, %v154
  %v182 = vpack.c.b16 %v157, %v156
  %v183 = vpack.c.b16 %v159, %v158
  %v184 = vpack.c.b16 %v161, %v160
  %v185 = vpack.c.b16 %v163, %v162
  %v186 = vpack.c.b16 %v165, %v164
  %v187 = vpack.c.b16 %v167, %v166
  %v188 = vpack.c.b16 %v169, %v168
  %v189 = vpack.c.b16 %v171, %v170
  %v190 = vpack.c.b16 %v173, %v172
  %v191 = vpack.c.b16 %v175, %v174
  %v224 = vunpack.c.l.b16 %v89
  %v225 = vunpack.c.l.b16 %v90
  %v226 = vunpack.c.l.b16 %v91
  %v227 = vunpack.c.l.b16 %v92
  %v228 = vunpack.c.l.b16 %v93
  %v229 = vunpack.c.l.b16 %v94
  %v230 = vunpack.c.l.b16 %v95
  %v231 = vunpack.c.l.b16 %v96
  %v232 = vunpack.c.l.b16 %v97
  %v233 = vunpack.c.l.b16 %v98
  %v234 = vunpack.c.l.b16 %v99
  %v235 = vunpack.c.l.b16 %v100
  %v236 = vunpack.c.l.b16 %v101
  %v237 = vunpack.c.l.b16 %v102
  %v238 = vunpack.c.l.b16 %v103
  %v239 = vunpack.c.l.b16 %v104
  %v240 = vpack.c.b16 %v225, %v224
  %v241 = vpack.c.b16 %v227, %v226
  %v242 = vpack.c.b16 %v229, %v228
  %v243 = vpack.c.b16 %v231, %v230
  %v244 = vpack.c.b16 %v233, %v232
  %v245 = vpack.c.b16 %v235, %v234
  %v246 = vpack.c.b16 %v237, %v236
  %v247 = vpack.c.b16 %v239, %v238
  %256 = vmatprep.subr.bf16.mxu0 0
  %257 = vmatpush1.bf16.msra.mxu0 %v240
  %258 = vmatprep.subr.bf16.mxu0 0
  %259 = vmatpush1.bf16.msra.mxu0 %v241
  %260 = vmatprep.subr.bf16.mxu0 0
  %261 = vmatpush1.bf16.msra.mxu0 %v242
  %262 = vmatprep.subr.bf16.mxu0 0
  %263 = vmatpush1.bf16.msra.mxu0 %v243
  %264 = vmatprep.subr.bf16.mxu0 0
  %265 = vmatpush1.bf16.msra.mxu0 %v244
  %266 = vmatprep.subr.bf16.mxu0 0
  %267 = vmatpush1.bf16.msra.mxu0 %v245
  %268 = vmatprep.subr.bf16.mxu0 0
  %269 = vmatpush1.bf16.msra.mxu0 %v246
  %270 = vmatprep.subr.bf16.mxu0 0
  %271 = vmatpush1.bf16.msra.mxu0 %v247
  %272 = vmatprep.subr.bf16.mxu0 0
  %273 = vmatpush1.bf16.msra.mxu0 0
  %274 = vmatprep.subr.bf16.mxu0 0
  %275 = vmatpush1.bf16.msra.mxu0 0
  %276 = vmatprep.subr.bf16.mxu0 0
  %277 = vmatpush1.bf16.msra.mxu0 0
  %278 = vmatprep.subr.bf16.mxu0 0
  %279 = vmatpush1.bf16.msra.mxu0 0
  %280 = vmatprep.subr.bf16.mxu0 0
  %281 = vmatpush1.bf16.msra.mxu0 0
  %282 = vmatprep.subr.bf16.mxu0 0
  %283 = vmatpush1.bf16.msra.mxu0 0
  %284 = vmatprep.subr.bf16.mxu0 0
  %285 = vmatpush1.bf16.msra.mxu0 0
  %286 = vmatprep.subr.bf16.mxu0 0
  %287 = vmatpush1.bf16.msra.mxu0 0
  %288 = vmatprep.mubr.bf16.mxu0 0
  %289 = vmatmul.mubr.bf16.gmra.mrb[0].mxu0 %v176
  %v290 = vpop.f32.mrb[0].mxu0
  %v291 = vadd.f32 %v110, %v290
  %v292 = vpop.f32.mrb[0].mxu0
  %v293 = vpop.f32.mrb[0].mxu0
  %v294 = vadd.f32 %v110, %v293
  %v295 = vpop.f32.mrb[0].mxu0
  %296 = vmatprep.mubr.bf16.mxu0 0
  %297 = vmatmul.mubr.bf16.gmra.mrb[0].mxu0 %v177
  %v298 = vpop.f32.mrb[0].mxu0
  %v299 = vadd.f32 %v110, %v298
  %v300 = vpop.f32.mrb[0].mxu0
  %v301 = vpop.f32.mrb[0].mxu0
  %v302 = vadd.f32 %v110, %v301
  %v303 = vpop.f32.mrb[0].mxu0
  %304 = vmatprep.mubr.bf16.mxu0 0
  %305 = vmatmul.mubr.bf16.gmra.mrb[0].mxu0 %v178
  %v306 = vpop.f32.mrb[0].mxu0
  %v307 = vadd.f32 %v110, %v306
  %v308 = vpop.f32.mrb[0].mxu0
  %v309 = vpop.f32.mrb[0].mxu0
  %v310 = vadd.f32 %v110, %v309
  %v311 = vpop.f32.mrb[0].mxu0
  %312 = vmatprep.mubr.bf16.mxu0 0
  %313 = vmatmul.mubr.bf16.gmra.mrb[0].mxu0 %v179
  %v314 = vpop.f32.mrb[0].mxu0
  %v315 = vadd.f32 %v110, %v314
  %v316 = vpop.f32.mrb[0].mxu0
  %v317 = vpop.f32.mrb[0].mxu0
  %v318 = vadd.f32 %v110, %v317
  %v319 = vpop.f32.mrb[0].mxu0
  %320 = vmatprep.mubr.bf16.mxu0 0
  %321 = vmatmul.mubr.bf16.gmra.mrb[0].mxu0 %v180
  %v322 = vpop.f32.mrb[0].mxu0
  %v323 = vadd.f32 %v110, %v322
  %v324 = vpop.f32.mrb[0].mxu0
  %v325 = vpop.f32.mrb[0].mxu0
  %v326 = vadd.f32 %v110, %v325
  %v327 = vpop.f32.mrb[0].mxu0
  %328 = vmatprep.mubr.bf16.mxu0 0
  %329 = vmatmul.mubr.bf16.gmra.mrb[0].mxu0 %v181
  %v330 = vpop.f32.mrb[0].mxu0
  %v331 = vadd.f32 %v110, %v330
  %v332 = vpop.f32.mrb[0].mxu0
  %v333 = vpop.f32.mrb[0].mxu0
  %v334 = vadd.f32 %v110, %v333
  %v335 = vpop.f32.mrb[0].mxu0
  %336 = vmatprep.mubr.bf16.mxu0 0
  %337 = vmatmul.mubr.bf16.gmra.mrb[0].mxu0 %v182
  %v338 = vpop.f32.mrb[0].mxu0
  %v339 = vadd.f32 %v110, %v338
  %v340 = vpop.f32.mrb[0].mxu0
  %v341 = vpop.f32.mrb[0].mxu0
  %v342 = vadd.f32 %v110, %v341
  %v343 = vpop.f32.mrb[0].mxu0
  %344 = vmatprep.mubr.bf16.mxu0 0
  %345 = vmatmul.mubr.bf16.gmra.mrb[0].mxu0 %v183
  %v346 = vpop.f32.mrb[0].mxu0
  %v347 = vadd.f32 %v110, %v346
  %v348 = vpop.f32.mrb[0].mxu0
  %v349 = vpop.f32.mrb[0].mxu0
  %v350 = vadd.f32 %v110, %v349
  %v351 = vpop.f32.mrb[0].mxu0
  %352 = vmatprep.mubr.bf16.mxu0 0
  %353 = vmatmul.mubr.bf16.gmra.mrb[0].mxu0 %v184
  %v354 = vpop.f32.mrb[0].mxu0
  %v355 = vadd.f32 %v110, %v354
  %v356 = vpop.f32.mrb[0].mxu0
  %v357 = vpop.f32.mrb[0].mxu0
  %v358 = vadd.f32 %v110, %v357
  %v359 = vpop.f32.mrb[0].mxu0
  %360 = vmatprep.mubr.bf16.mxu0 0
  %361 = vmatmul.mubr.bf16.gmra.mrb[0].mxu0 %v185
  %v362 = vpop.f32.mrb[0].mxu0
  %v363 = vadd.f32 %v110, %v362
  %v364 = vpop.f32.mrb[0].mxu0
  %v365 = vpop.f32.mrb[0].mxu0
  %v366 = vadd.f32 %v110, %v365
  %v367 = vpop.f32.mrb[0].mxu0
  %368 = vmatprep.mubr.bf16.mxu0 0
  %369 = vmatmul.mubr.bf16.gmra.mrb[0].mxu0 %v186
  %v370 = vpop.f32.mrb[0].mxu0
  %v371 = vadd.f32 %v110, %v370
  %v372 = vpop.f32.mrb[0].mxu0
  %v373 = vpop.f32.mrb[0].mxu0
  %v374 = vadd.f32 %v110, %v373
  %v375 = vpop.f32.mrb[0].mxu0
  %376 = vmatprep.mubr.bf16.mxu0 0
  %377 = vmatmul.mubr.bf16.gmra.mrb[0].mxu0 %v187
  %v378 = vpop.f32.mrb[0].mxu0
  %v379 = vadd.f32 %v110, %v378
  %v380 = vpop.f32.mrb[0].mxu0
  %v381 = vpop.f32.mrb[0].mxu0
  %v382 = vadd.f32 %v110, %v381
  %v383 = vpop.f32.mrb[0].mxu0
  %384 = vmatprep.mubr.bf16.mxu0 0
  %385 = vmatmul.mubr.bf16.gmra.mrb[0].mxu0 %v188
  %v386 = vpop.f32.mrb[0].mxu0
  %v387 = vadd.f32 %v110, %v386
  %v388 = vpop.f32.mrb[0].mxu0
  %v389 = vpop.f32.mrb[0].mxu0
  %v390 = vadd.f32 %v110, %v389
  %v391 = vpop.f32.mrb[0].mxu0
  %392 = vmatprep.mubr.bf16.mxu0 0
  %393 = vmatmul.mubr.bf16.gmra.mrb[0].mxu0 %v189
  %v394 = vpop.f32.mrb[0].mxu0
  %v395 = vadd.f32 %v110, %v394
  %v396 = vpop.f32.mrb[0].mxu0
  %v397 = vpop.f32.mrb[0].mxu0
  %v398 = vadd.f32 %v110, %v397
  %v399 = vpop.f32.mrb[0].mxu0
  %400 = vmatprep.mubr.bf16.mxu0 0
  %401 = vmatmul.mubr.bf16.gmra.mrb[0].mxu0 %v190
  %v402 = vpop.f32.mrb[0].mxu0
  %v403 = vadd.f32 %v110, %v402
  %v404 = vpop.f32.mrb[0].mxu0
  %v405 = vpop.f32.mrb[0].mxu0
  %v406 = vadd.f32 %v110, %v405
  %v407 = vpop.f32.mrb[0].mxu0
  %408 = vmatprep.mubr.bf16.mxu0 0
  %409 = vmatmul.mubr.bf16.gmra.mrb[0].mxu0 %v191
  %v410 = vpop.f32.mrb[0].mxu0
  %v411 = vadd.f32 %v110, %v410
  %v412 = vpop.f32.mrb[0].mxu0
  %v413 = vpop.f32.mrb[0].mxu0
  %v414 = vadd.f32 %v110, %v413
  %v415 = vpop.f32.mrb[0].mxu0
  %416 = vdwg.mxu0
  %v417 = vmax.f32 %v291, 0.0
  %v418 = vmax.f32 %v294, 0.0
  %v419 = vmax.f32 %v299, 0.0
  %v420 = vmax.f32 %v302, 0.0
  %v421 = vmax.f32 %v307, 0.0
  %v422 = vmax.f32 %v310, 0.0
  %v423 = vmax.f32 %v315, 0.0
  %v424 = vmax.f32 %v318, 0.0
  %v425 = vmax.f32 %v323, 0.0
  %v426 = vmax.f32 %v326, 0.0
  %v427 = vmax.f32 %v331, 0.0
  %v428 = vmax.f32 %v334, 0.0
  %v429 = vmax.f32 %v339, 0.0
  %v430 = vmax.f32 %v342, 0.0
  %v431 = vmax.f32 %v347, 0.0
  %v432 = vmax.f32 %v350, 0.0
  %v433 = vmax.f32 %v355, 0.0
  %v434 = vmax.f32 %v358, 0.0
  %v435 = vmax.f32 %v363, 0.0
  %v436 = vmax.f32 %v366, 0.0
  %v437 = vmax.f32 %v371, 0.0
  %v438 = vmax.f32 %v374, 0.0
  %v439 = vmax.f32 %v379, 0.0
  %v440 = vmax.f32 %v382, 0.0
  %v441 = vmax.f32 %v387, 0.0
  %v442 = vmax.f32 %v390, 0.0
  %v443 = vmax.f32 %v395, 0.0
  %v444 = vmax.f32 %v398, 0.0
  %v445 = vmax.f32 %v403, 0.0
  %v446 = vmax.f32 %v406, 0.0
  %v447 = vmax.f32 %v411, 0.0
  %v448 = vmax.f32 %v414, 0.0
  %v449 = vld [vmem:[#allocation2] sm:$0xff]
  %v450 = vld [vmem:[#allocation2 + $0x8] sm:$0xff]
  %v451 = vld [vmem:[#allocation2 + $0x10] sm:$0xff]
  %v452 = vld [vmem:[#allocation2 + $0x18] sm:$0xff]
  %v453 = vld [vmem:[#allocation2 + $0x20] sm:$0xff]
  %v454 = vld [vmem:[#allocation2 + $0x28] sm:$0xff]
  %v455 = vld [vmem:[#allocation2 + $0x30] sm:$0xff]
  %v456 = vld [vmem:[#allocation2 + $0x38] sm:$0xff]
  %v457 = vld [vmem:[#allocation2 + $0x40] sm:$0xff]
  %v458 = vld [vmem:[#allocation2 + $0x48] sm:$0xff]
  %v459 = vld [vmem:[#allocation2 + $0x50] sm:$0xff]
  %v460 = vld [vmem:[#allocation2 + $0x58] sm:$0xff]
  %v461 = vld [vmem:[#allocation2 + $0x60] sm:$0xff]
  %v462 = vld [vmem:[#allocation2 + $0x68] sm:$0xff]
  %v463 = vld [vmem:[#allocation2 + $0x70] sm:$0xff]
  %v464 = vld [vmem:[#allocation2 + $0x78] sm:$0xff]
  %v465 = vld [vmem:[#allocation2 + $0x80] sm:$0xff]
  %v466 = vld [vmem:[#allocation2 + $0x88] sm:$0xff]
  %v467 = vld [vmem:[#allocation2 + $0x90] sm:$0xff]
  %v468 = vld [vmem:[#allocation2 + $0x98] sm:$0xff]
  %v469 = vld [vmem:[#allocation2 + $0xa0] sm:$0xff]
  %v470 = vld [vmem:[#allocation2 + $0xa8] sm:$0xff]
  %v471 = vld [vmem:[#allocation2 + $0xb0] sm:$0xff]
  %v472 = vld [vmem:[#allocation2 + $0xb8] sm:$0xff]
  %v473 = vld [vmem:[#allocation2 + $0xc0] sm:$0xff]
  %v474 = vld [vmem:[#allocation2 + $0xc8] sm:$0xff]
  %v475 = vld [vmem:[#allocation2 + $0xd0] sm:$0xff]
  %v476 = vld [vmem:[#allocation2 + $0xd8] sm:$0xff]
  %v477 = vld [vmem:[#allocation2 + $0xe0] sm:$0xff]
  %v478 = vld [vmem:[#allocation2 + $0xe8] sm:$0xff]
  %v479 = vld [vmem:[#allocation2 + $0xf0] sm:$0xff]
  %v480 = vld [vmem:[#allocation2 + $0xf8] sm:$0xff]
  %v481 = vpack.c.bf16 %v418, %v417
  %v482 = vpack.c.bf16 %v420, %v419
  %v483 = vpack.c.bf16 %v422, %v421
  %v484 = vpack.c.bf16 %v424, %v423
  %v485 = vpack.c.bf16 %v426, %v425
  %v486 = vpack.c.bf16 %v428, %v427
  %v487 = vpack.c.bf16 %v430, %v429
  %v488 = vpack.c.bf16 %v432, %v431
  %v489 = vpack.c.bf16 %v434, %v433
  %v490 = vpack.c.bf16 %v436, %v435
  %v491 = vpack.c.bf16 %v438, %v437
  %v492 = vpack.c.bf16 %v440, %v439
  %v493 = vpack.c.bf16 %v442, %v441
  %v494 = vpack.c.bf16 %v444, %v443
  %v495 = vpack.c.bf16 %v446, %v445
  %v496 = vpack.c.bf16 %v448, %v447
  %v497 = vld [vmem:[%s3] sm:$0xf]
  %v498 = vld [vmem:[%s3 + $0x4] sm:$0xf]
  %v499 = vld [vmem:[%s3 + $0x8] sm:$0xf]
  %v500 = vld [vmem:[%s3 + $0xc] sm:$0xf]
  %v501 = vld [vmem:[%s3 + $0x10] sm:$0xf]
  %v502 = vld [vmem:[%s3 + $0x14] sm:$0xf]
  %v503 = vld [vmem:[%s3 + $0x18] sm:$0xf]
  %v504 = vld [vmem:[%s3 + $0x1c] sm:$0xf]
  %v505 = vld [vmem:[%s3 + $0x20] sm:$0xf]
  %v506 = vld [vmem:[%s3 + $0x24] sm:$0xf]
  %v507 = vld [vmem:[%s3 + $0x28] sm:$0xf]
  %v508 = vld [vmem:[%s3 + $0x2c] sm:$0xf]
  %v509 = vld [vmem:[%s3 + $0x30] sm:$0xf]
  %v510 = vld [vmem:[%s3 + $0x34] sm:$0xf]
  %v511 = vld [vmem:[%s3 + $0x38] sm:$0xf]
  %v512 = vld [vmem:[%s3 + $0x3c] sm:$0xf]
  %v529 = vunpack.c.l.b16 %v497
  %v530 = vunpack.c.l.b16 %v498
  %v531 = vunpack.c.l.b16 %v499
  %v532 = vunpack.c.l.b16 %v500
  %v533 = vunpack.c.l.b16 %v501
  %v534 = vunpack.c.l.b16 %v502
  %v535 = vunpack.c.l.b16 %v503
  %v536 = vunpack.c.l.b16 %v504
  %v537 = vunpack.c.l.b16 %v505
  %v538 = vunpack.c.l.b16 %v506
  %v539 = vunpack.c.l.b16 %v507
  %v540 = vunpack.c.l.b16 %v508
  %v541 = vunpack.c.l.b16 %v509
  %v542 = vunpack.c.l.b16 %v510
  %v543 = vunpack.c.l.b16 %v511
  %v544 = vunpack.c.l.b16 %v512
  %v545 = vpack.c.b16 %v530, %v529
  %v546 = vpack.c.b16 %v532, %v531
  %v547 = vpack.c.b16 %v534, %v533
  %v548 = vpack.c.b16 %v536, %v535
  %v549 = vpack.c.b16 %v538, %v537
  %v550 = vpack.c.b16 %v540, %v539
  %v551 = vpack.c.b16 %v542, %v541
  %v552 = vpack.c.b16 %v544, %v543
  %561 = vmatprep.subr.bf16.mxu0 0
  %562 = vmatpush1.bf16.msra.mxu0 %v545
  %563 = vmatprep.subr.bf16.mxu0 0
  %564 = vmatpush1.bf16.msra.mxu0 %v546
  %565 = vmatprep.subr.bf16.mxu0 0
  %566 = vmatpush1.bf16.msra.mxu0 %v547
  %567 = vmatprep.subr.bf16.mxu0 0
  %568 = vmatpush1.bf16.msra.mxu0 %v548
  %569 = vmatprep.subr.bf16.mxu0 0
  %570 = vmatpush1.bf16.msra.mxu0 %v549
  %571 = vmatprep.subr.bf16.mxu0 0
  %572 = vmatpush1.bf16.msra.mxu0 %v550
  %573 = vmatprep.subr.bf16.mxu0 0
  %574 = vmatpush1.bf16.msra.mxu0 %v551
  %575 = vmatprep.subr.bf16.mxu0 0
  %576 = vmatpush1.bf16.msra.mxu0 %v552
  %577 = vmatprep.subr.bf16.mxu0 0
  %578 = vmatpush1.bf16.msra.mxu0 0
  %579 = vmatprep.subr.bf16.mxu0 0
  %580 = vmatpush1.bf16.msra.mxu0 0
  %581 = vmatprep.subr.bf16.mxu0 0
  %582 = vmatpush1.bf16.msra.mxu0 0
  %583 = vmatprep.subr.bf16.mxu0 0
  %584 = vmatpush1.bf16.msra.mxu0 0
  %585 = vmatprep.subr.bf16.mxu0 0
  %586 = vmatpush1.bf16.msra.mxu0 0
  %587 = vmatprep.subr.bf16.mxu0 0
  %588 = vmatpush1.bf16.msra.mxu0 0
  %589 = vmatprep.subr.bf16.mxu0 0
  %590 = vmatpush1.bf16.msra.mxu0 0
  %591 = vmatprep.subr.bf16.mxu0 0
  %592 = vmatpush1.bf16.msra.mxu0 0
  %593 = vmatprep.mubr.bf16.mxu0 0
  %594 = vmatmul.mubr.bf16.gmra.mrb[0].mxu0 %v481
  %v595 = vpop.f32.mrb[0].mxu0
  %v596 = vadd.f32 0.0, %v595
  %v597 = vpop.f32.mrb[0].mxu0
  %v598 = vpop.f32.mrb[0].mxu0
  %v599 = vadd.f32 0.0, %v598
  %v600 = vpop.f32.mrb[0].mxu0
  %601 = vmatprep.mubr.bf16.mxu0 0
  %602 = vmatmul.mubr.bf16.gmra.mrb[0].mxu0 %v482
  %v603 = vpop.f32.mrb[0].mxu0
  %v604 = vadd.f32 0.0, %v603
  %v605 = vpop.f32.mrb[0].mxu0
  %v606 = vpop.f32.mrb[0].mxu0
  %v607 = vadd.f32 0.0, %v606
  %v608 = vpop.f32.mrb[0].mxu0
  %609 = vmatprep.mubr.bf16.mxu0 0
  %610 = vmatmul.mubr.bf16.gmra.mrb[0].mxu0 %v483
  %v611 = vpop.f32.mrb[0].mxu0
  %v612 = vadd.f32 0.0, %v611
  %v613 = vpop.f32.mrb[0].mxu0
  %v614 = vpop.f32.mrb[0].mxu0
  %v615 = vadd.f32 0.0, %v614
  %v616 = vpop.f32.mrb[0].mxu0
  %617 = vmatprep.mubr.bf16.mxu0 0
  %618 = vmatmul.mubr.bf16.gmra.mrb[0].mxu0 %v484
  %v619 = vpop.f32.mrb[0].mxu0
  %v620 = vadd.f32 0.0, %v619
  %v621 = vpop.f32.mrb[0].mxu0
  %v622 = vpop.f32.mrb[0].mxu0
  %v623 = vadd.f32 0.0, %v622
  %v624 = vpop.f32.mrb[0].mxu0
  %625 = vmatprep.mubr.bf16.mxu0 0
  %626 = vmatmul.mubr.bf16.gmra.mrb[0].mxu0 %v485
  %v627 = vpop.f32.mrb[0].mxu0
  %v628 = vadd.f32 0.0, %v627
  %v629 = vpop.f32.mrb[0].mxu0
  %v630 = vpop.f32.mrb[0].mxu0
  %v631 = vadd.f32 0.0, %v630
  %v632 = vpop.f32.mrb[0].mxu0
  %633 = vmatprep.mubr.bf16.mxu0 0
  %634 = vmatmul.mubr.bf16.gmra.mrb[0].mxu0 %v486
  %v635 = vpop.f32.mrb[0].mxu0
  %v636 = vadd.f32 0.0, %v635
  %v637 = vpop.f32.mrb[0].mxu0
  %v638 = vpop.f32.mrb[0].mxu0
  %v639 = vadd.f32 0.0, %v638
  %v640 = vpop.f32.mrb[0].mxu0
  %641 = vmatprep.mubr.bf16.mxu0 0
  %642 = vmatmul.mubr.bf16.gmra.mrb[0].mxu0 %v487
  %v643 = vpop.f32.mrb[0].mxu0
  %v644 = vadd.f32 0.0, %v643
  %v645 = vpop.f32.mrb[0].mxu0
  %v646 = vpop.f32.mrb[0].mxu0
  %v647 = vadd.f32 0.0, %v646
  %v648 = vpop.f32.mrb[0].mxu0
  %649 = vmatprep.mubr.bf16.mxu0 0
  %650 = vmatmul.mubr.bf16.gmra.mrb[0].mxu0 %v488
  %v651 = vpop.f32.mrb[0].mxu0
  %v652 = vadd.f32 0.0, %v651
  %v653 = vpop.f32.mrb[0].mxu0
  %v654 = vpop.f32.mrb[0].mxu0
  %v655 = vadd.f32 0.0, %v654
  %v656 = vpop.f32.mrb[0].mxu0
  %657 = vmatprep.mubr.bf16.mxu0 0
  %658 = vmatmul.mubr.bf16.gmra.mrb[0].mxu0 %v489
  %v659 = vpop.f32.mrb[0].mxu0
  %v660 = vadd.f32 0.0, %v659
  %v661 = vpop.f32.mrb[0].mxu0
  %v662 = vpop.f32.mrb[0].mxu0
  %v663 = vadd.f32 0.0, %v662
  %v664 = vpop.f32.mrb[0].mxu0
  %665 = vmatprep.mubr.bf16.mxu0 0
  %666 = vmatmul.mubr.bf16.gmra.mrb[0].mxu0 %v490
  %v667 = vpop.f32.mrb[0].mxu0
  %v668 = vadd.f32 0.0, %v667
  %v669 = vpop.f32.mrb[0].mxu0
  %v670 = vpop.f32.mrb[0].mxu0
  %v671 = vadd.f32 0.0, %v670
  %v672 = vpop.f32.mrb[0].mxu0
  %673 = vmatprep.mubr.bf16.mxu0 0
  %674 = vmatmul.mubr.bf16.gmra.mrb[0].mxu0 %v491
  %v675 = vpop.f32.mrb[0].mxu0
  %v676 = vadd.f32 0.0, %v675
  %v677 = vpop.f32.mrb[0].mxu0
  %v678 = vpop.f32.mrb[0].mxu0
  %v679 = vadd.f32 0.0, %v678
  %v680 = vpop.f32.mrb[0].mxu0
  %681 = vmatprep.mubr.bf16.mxu0 0
  %682 = vmatmul.mubr.bf16.gmra.mrb[0].mxu0 %v492
  %v683 = vpop.f32.mrb[0].mxu0
  %v684 = vadd.f32 0.0, %v683
  %v685 = vpop.f32.mrb[0].mxu0
  %v686 = vpop.f32.mrb[0].mxu0
  %v687 = vadd.f32 0.0, %v686
  %v688 = vpop.f32.mrb[0].mxu0
  %689 = vmatprep.mubr.bf16.mxu0 0
  %690 = vmatmul.mubr.bf16.gmra.mrb[0].mxu0 %v493
  %v691 = vpop.f32.mrb[0].mxu0
  %v692 = vadd.f32 0.0, %v691
  %v693 = vpop.f32.mrb[0].mxu0
  %v694 = vpop.f32.mrb[0].mxu0
  %v695 = vadd.f32 0.0, %v694
  %v696 = vpop.f32.mrb[0].mxu0
  %697 = vmatprep.mubr.bf16.mxu0 0
  %698 = vmatmul.mubr.bf16.gmra.mrb[0].mxu0 %v494
  %v699 = vpop.f32.mrb[0].mxu0
  %v700 = vadd.f32 0.0, %v699
  %v701 = vpop.f32.mrb[0].mxu0
  %v702 = vpop.f32.mrb[0].mxu0
  %v703 = vadd.f32 0.0, %v702
  %v704 = vpop.f32.mrb[0].mxu0
  %705 = vmatprep.mubr.bf16.mxu0 0
  %706 = vmatmul.mubr.bf16.gmra.mrb[0].mxu0 %v495
  %v707 = vpop.f32.mrb[0].mxu0
  %v708 = vadd.f32 0.0, %v707
  %v709 = vpop.f32.mrb[0].mxu0
  %v710 = vpop.f32.mrb[0].mxu0
  %v711 = vadd.f32 0.0, %v710
  %v712 = vpop.f32.mrb[0].mxu0
  %713 = vmatprep.mubr.bf16.mxu0 0
  %714 = vmatmul.mubr.bf16.gmra.mrb[0].mxu0 %v496
  %v715 = vpop.f32.mrb[0].mxu0
  %v716 = vadd.f32 0.0, %v715
  %v717 = vpop.f32.mrb[0].mxu0
  %v718 = vpop.f32.mrb[0].mxu0
  %v719 = vadd.f32 0.0, %v718
  %v720 = vpop.f32.mrb[0].mxu0
  %721 = vdwg.mxu0
  %v722 = vadd.f32 %v449, %v596
  %v723 = vadd.f32 %v450, %v599
  %v724 = vadd.f32 %v451, %v604
  %v725 = vadd.f32 %v452, %v607
  %v726 = vadd.f32 %v453, %v612
  %v727 = vadd.f32 %v454, %v615
  %v728 = vadd.f32 %v455, %v620
  %v729 = vadd.f32 %v456, %v623
  %v730 = vadd.f32 %v457, %v628
  %v731 = vadd.f32 %v458, %v631
  %v732 = vadd.f32 %v459, %v636
  %v733 = vadd.f32 %v460, %v639
  %v734 = vadd.f32 %v461, %v644
  %v735 = vadd.f32 %v462, %v647
  %v736 = vadd.f32 %v463, %v652
  %v737 = vadd.f32 %v464, %v655
  %v738 = vadd.f32 %v465, %v660
  %v739 = vadd.f32 %v466, %v663
  %v740 = vadd.f32 %v467, %v668
  %v741 = vadd.f32 %v468, %v671
  %v742 = vadd.f32 %v469, %v676
  %v743 = vadd.f32 %v470, %v679
  %v744 = vadd.f32 %v471, %v684
  %v745 = vadd.f32 %v472, %v687
  %v746 = vadd.f32 %v473, %v692
  %v747 = vadd.f32 %v474, %v695
  %v748 = vadd.f32 %v475, %v700
  %v749 = vadd.f32 %v476, %v703
  %v750 = vadd.f32 %v477, %v708
  %v751 = vadd.f32 %v478, %v711
  %v752 = vadd.f32 %v479, %v716
  %v753 = vadd.f32 %v480, %v719
  %754 = vst [vmem:[#allocation2] sm:$0xff] %v722
  %755 = vst [vmem:[#allocation2 + $0x8] sm:$0xff] %v723
  %756 = vst [vmem:[#allocation2 + $0x10] sm:$0xff] %v724
  %757 = vst [vmem:[#allocation2 + $0x18] sm:$0xff] %v725
  %758 = vst [vmem:[#allocation2 + $0x20] sm:$0xff] %v726
  %759 = vst [vmem:[#allocation2 + $0x28] sm:$0xff] %v727
  %760 = vst [vmem:[#allocation2 + $0x30] sm:$0xff] %v728
  %761 = vst [vmem:[#allocation2 + $0x38] sm:$0xff] %v729
  %762 = vst [vmem:[#allocation2 + $0x40] sm:$0xff] %v730
  %763 = vst [vmem:[#allocation2 + $0x48] sm:$0xff] %v731
  %764 = vst [vmem:[#allocation2 + $0x50] sm:$0xff] %v732
  %765 = vst [vmem:[#allocation2 + $0x58] sm:$0xff] %v733
  %766 = vst [vmem:[#allocation2 + $0x60] sm:$0xff] %v734
  %767 = vst [vmem:[#allocation2 + $0x68] sm:$0xff] %v735
  %768 = vst [vmem:[#allocation2 + $0x70] sm:$0xff] %v736
  %769 = vst [vmem:[#allocation2 + $0x78] sm:$0xff] %v737
  %770 = vst [vmem:[#allocation2 + $0x80] sm:$0xff] %v738
  %771 = vst [vmem:[#allocation2 + $0x88] sm:$0xff] %v739
  %772 = vst [vmem:[#allocation2 + $0x90] sm:$0xff] %v740
  %773 = vst [vmem:[#allocation2 + $0x98] sm:$0xff] %v741
  %774 = vst [vmem:[#allocation2 + $0xa0] sm:$0xff] %v742
  %775 = vst [vmem:[#allocation2 + $0xa8] sm:$0xff] %v743
  %776 = vst [vmem:[#allocation2 + $0xb0] sm:$0xff] %v744
  %777 = vst [vmem:[#allocation2 + $0xb8] sm:$0xff] %v745
  %778 = vst [vmem:[#allocation2 + $0xc0] sm:$0xff] %v746
  %779 = vst [vmem:[#allocation2 + $0xc8] sm:$0xff] %v747
  %780 = vst [vmem:[#allocation2 + $0xd0] sm:$0xff] %v748
  %781 = vst [vmem:[#allocation2 + $0xd8] sm:$0xff] %v749
  %782 = vst [vmem:[#allocation2 + $0xe0] sm:$0xff] %v750
  %783 = vst [vmem:[#allocation2 + $0xe8] sm:$0xff] %v751
  %784 = vst [vmem:[#allocation2 + $0xf0] sm:$0xff] %v752
  %785 = vst [vmem:[#allocation2 + $0xf8] sm:$0xff] %v753
  // Predicated region
  $region26: #{positionwise_feed_forward.1} parent=0 // pred_check
    %p786 = pneg %p21
  $region27: #{positionwise_feed_forward.1} parent=0 // pred_check_branch
    %788 = sbr.rel (%p786) target = $region29
  $region28: #{positionwise_feed_forward.1} parent=0 // pred_region
    %v789 = vld [vmem:[#allocation2] sm:$0xff]
    %v790 = vld [vmem:[#allocation2 + $0x8] sm:$0xff]
    %v791 = vld [vmem:[#allocation2 + $0x10] sm:$0xff]
    %v792 = vld [vmem:[#allocation2 + $0x18] sm:$0xff]
    %v793 = vld [vmem:[#allocation2 + $0x20] sm:$0xff]
    %v794 = vld [vmem:[#allocation2 + $0x28] sm:$0xff]
    %v795 = vld [vmem:[#allocation2 + $0x30] sm:$0xff]
    %v796 = vld [vmem:[#allocation2 + $0x38] sm:$0xff]
    %v797 = vld [vmem:[#allocation2 + $0x40] sm:$0xff]
    %v798 = vld [vmem:[#allocation2 + $0x48] sm:$0xff]
    %v799 = vld [vmem:[#allocation2 + $0x50] sm:$0xff]
    %v800 = vld [vmem:[#allocation2 + $0x58] sm:$0xff]
    %v801 = vld [vmem:[#allocation2 + $0x60] sm:$0xff]
    %v802 = vld [vmem:[#allocation2 + $0x68] sm:$0xff]
    %v803 = vld [vmem:[#allocation2 + $0x70] sm:$0xff]
    %v804 = vld [vmem:[#allocation2 + $0x78] sm:$0xff]
    %v805 = vld [vmem:[#allocation2 + $0x80] sm:$0xff]
    %v806 = vld [vmem:[#allocation2 + $0x88] sm:$0xff]
    %v807 = vld [vmem:[#allocation2 + $0x90] sm:$0xff]
    %v808 = vld [vmem:[#allocation2 + $0x98] sm:$0xff]
    %v809 = vld [vmem:[#allocation2 + $0xa0] sm:$0xff]
    %v810 = vld [vmem:[#allocation2 + $0xa8] sm:$0xff]
    %v811 = vld [vmem:[#allocation2 + $0xb0] sm:$0xff]
    %v812 = vld [vmem:[#allocation2 + $0xb8] sm:$0xff]
    %v813 = vld [vmem:[#allocation2 + $0xc0] sm:$0xff]
    %v814 = vld [vmem:[#allocation2 + $0xc8] sm:$0xff]
    %v815 = vld [vmem:[#allocation2 + $0xd0] sm:$0xff]
    %v816 = vld [vmem:[#allocation2 + $0xd8] sm:$0xff]
    %v817 = vld [vmem:[#allocation2 + $0xe0] sm:$0xff]
    %v818 = vld [vmem:[#allocation2 + $0xe8] sm:$0xff]
    %v819 = vld [vmem:[#allocation2 + $0xf0] sm:$0xff]
    %v820 = vld [vmem:[#allocation2 + $0xf8] sm:$0xff]
    %v821 = vld [vmem:[%s4] sm:$0x1]
    %v823 = vlaneseq
    %v824 = vshrl.u32 %v823, 7
    %v825 = vsub.s32 0, %v824
    %v826 = vrot.slane %v821, %v825
    %v828 = vadd.f32 %v789, %v826
    %v829 = vadd.f32 %v790, %v826
    %v830 = vadd.f32 %v791, %v826
    %v831 = vadd.f32 %v792, %v826
    %v832 = vadd.f32 %v793, %v826
    %v833 = vadd.f32 %v794, %v826
    %v834 = vadd.f32 %v795, %v826
    %v835 = vadd.f32 %v796, %v826
    %v836 = vadd.f32 %v797, %v826
    %v837 = vadd.f32 %v798, %v826
    %v838 = vadd.f32 %v799, %v826
    %v839 = vadd.f32 %v800, %v826
    %v840 = vadd.f32 %v801, %v826
    %v841 = vadd.f32 %v802, %v826
    %v842 = vadd.f32 %v803, %v826
    %v843 = vadd.f32 %v804, %v826
    %v844 = vadd.f32 %v805, %v826
    %v845 = vadd.f32 %v806, %v826
    %v846 = vadd.f32 %v807, %v826
    %v847 = vadd.f32 %v808, %v826
    %v848 = vadd.f32 %v809, %v826
    %v849 = vadd.f32 %v810, %v826
    %v850 = vadd.f32 %v811, %v826
    %v851 = vadd.f32 %v812, %v826
    %v852 = vadd.f32 %v813, %v826
    %v853 = vadd.f32 %v814, %v826
    %v854 = vadd.f32 %v815, %v826
    %v855 = vadd.f32 %v816, %v826
    %v856 = vadd.f32 %v817, %v826
    %v857 = vadd.f32 %v818, %v826
    %v858 = vadd.f32 %v819, %v826
    %v859 = vadd.f32 %v820, %v826
    %860 = vst [vmem:[%s5] sm:$0xff] %v828
    %861 = vst [vmem:[%s5 + $0x8] sm:$0xff] %v829
    %862 = vst [vmem:[%s5 + $0x10] sm:$0xff] %v830
    %863 = vst [vmem:[%s5 + $0x18] sm:$0xff] %v831
    %864 = vst [vmem:[%s5 + $0x20] sm:$0xff] %v832
    %865 = vst [vmem:[%s5 + $0x28] sm:$0xff] %v833
    %866 = vst [vmem:[%s5 + $0x30] sm:$0xff] %v834
    %867 = vst [vmem:[%s5 + $0x38] sm:$0xff] %v835
    %868 = vst [vmem:[%s5 + $0x40] sm:$0xff] %v836
    %869 = vst [vmem:[%s5 + $0x48] sm:$0xff] %v837
    %870 = vst [vmem:[%s5 + $0x50] sm:$0xff] %v838
    %871 = vst [vmem:[%s5 + $0x58] sm:$0xff] %v839
    %872 = vst [vmem:[%s5 + $0x60] sm:$0xff] %v840
    %873 = vst [vmem:[%s5 + $0x68] sm:$0xff] %v841
    %874 = vst [vmem:[%s5 + $0x70] sm:$0xff] %v842
    %875 = vst [vmem:[%s5 + $0x78] sm:$0xff] %v843
    %876 = vst [vmem:[%s5 + $0x80] sm:$0xff] %v844
    %877 = vst [vmem:[%s5 + $0x88] sm:$0xff] %v845
    %878 = vst [vmem:[%s5 + $0x90] sm:$0xff] %v846
    %879 = vst [vmem:[%s5 + $0x98] sm:$0xff] %v847
    %880 = vst [vmem:[%s5 + $0xa0] sm:$0xff] %v848
    %881 = vst [vmem:[%s5 + $0xa8] sm:$0xff] %v849
    %882 = vst [vmem:[%s5 + $0xb0] sm:$0xff] %v850
    %883 = vst [vmem:[%s5 + $0xb8] sm:$0xff] %v851
    %884 = vst [vmem:[%s5 + $0xc0] sm:$0xff] %v852
    %885 = vst [vmem:[%s5 + $0xc8] sm:$0xff] %v853
    %886 = vst [vmem:[%s5 + $0xd0] sm:$0xff] %v854
    %887 = vst [vmem:[%s5 + $0xd8] sm:$0xff] %v855
    %888 = vst [vmem:[%s5 + $0xe0] sm:$0xff] %v856
    %889 = vst [vmem:[%s5 + $0xe8] sm:$0xff] %v857
    %890 = vst [vmem:[%s5 + $0xf0] sm:$0xff] %v858
    %891 = vst [vmem:[%s5 + $0xf8] sm:$0xff] %v859
  $region29: #{positionwise_feed_forward.1} parent=0 // pred_fallthru
    _
  // Predicated region
  $region30: #{positionwise_feed_forward.1} parent=0 // pred_check
    _
  $region31: #{positionwise_feed_forward.1} parent=0 // pred_check_branch
    %893 = sbr.rel (0) target = $region33
  $region32: #{positionwise_feed_forward.1} parent=0 // pred_region
    _
  $region33: #{positionwise_feed_forward.1} parent=0 // pred_fallthru
    _
  // Predicated region
  $region34: #{positionwise_feed_forward.1} parent=0 // pred_check
    _
  $region35: #{positionwise_feed_forward.1} parent=0 // pred_check_branch
    %895 = sbr.rel (0) target = $region37
  $region36: #{positionwise_feed_forward.1} parent=0 // pred_region
    _
  $region37: #{positionwise_feed_forward.1} parent=0 // pred_fallthru
    _

</llo_original>
